<compile_context>
chip_gen: v7x
topology: tpu7x:2x2x1
jax: 0.10.0
libtpu: 0.0.40
codegen_flags: <defaults>
</compile_context>

<pallas_src>
import jax
import jax.numpy as jnp
from jax.experimental import pallas as pl
from jax.experimental.pallas import tpu as pltpu

INP_DIM = 2        # number of stacked scalar inputs (features)
HIDDEN = 32        # num_hidden
NUM_LAYERS = 2     # number of ResNet middle layers
N = 16             # batch size (number of sample points)


def mlp_resnet_kernel(x_ref, w_in_ref, b_in_ref, w_mid_ref, b_mid_ref,
                      w_out_ref, b_out_ref, o_ref):
    # x_ref: (INP_DIM, N) — features on sublanes, batch on lanes.
    x = x_ref[...]

    # layer_in on the VPU: K=INP_DIM contraction as broadcast multiply-adds.
    #   h[j, n] = sum_k w_in_t[j, k] * x[k, n] + b_in[j]
    h = w_in_ref[:, 0:1] * x[0:1, :] + b_in_ref[...]          # (H, 1)*(1, N)+(H, 1)
    for k in range(1, INP_DIM):
        h = h + w_in_ref[:, k:k + 1] * x[k:k + 1, :]

    # middle ResNet layers on the MXU: h = tanh(W @ h + b) + h  (static unroll)
    for l in range(NUM_LAYERS):
        w = w_mid_ref[l]                                       # (H, H)
        b = b_mid_ref[l]                                       # (H, 1)
        h = jnp.tanh(jnp.dot(w, h, preferred_element_type=jnp.float32) + b) + h

    # layer_out as an elementwise mul + sublane (XLU) reduction — no MXU.
    #   y[0, n] = sum_j w_out[j, 0] * h[j, n] + b_out
    y = jnp.sum(h * w_out_ref[...], axis=0, keepdims=True) + b_out_ref[...]
    o_ref[...] = y.astype(o_ref.dtype)                         # (1, N) lane-dense


def nn_function_resnet(inputs, params):
    """inputs: list of 1-D arrays of shape (N,). Returns (N,)."""
    w_in, b_in, w_mid, b_mid, w_out, b_out = params

    # glue: emulate torch.stack(inputs, dim=1), but feature-major (INP_DIM, N)
    # so the batch rides on the lane axis inside the kernel.
    xT = jnp.stack(inputs, axis=0)                    # (INP_DIM, N)
    n = xT.shape[1]

    # Host-side (XLA) layout conversion of the weights for the kernel.
    w_in_t = w_in.T                                   # (H, INP_DIM)
    b_in_t = b_in.T                                   # (H, 1)
    w_mid_t = jnp.transpose(w_mid, (0, 2, 1))         # (L, H, H): h_new = W @ h
    b_mid_t = jnp.transpose(b_mid, (0, 2, 1))         # (L, H, 1)

    vmem = pl.BlockSpec(memory_space=pltpu.MemorySpace.VMEM)

    out2d = pl.pallas_call(
        mlp_resnet_kernel,
        out_shape=jax.ShapeDtypeStruct((1, n), jnp.float32),
        in_specs=[vmem, vmem, vmem, vmem, vmem, vmem, vmem],
        out_specs=vmem,
    )(xT, w_in_t, b_in_t, w_mid_t, b_mid_t, w_out, b_out)

    # glue: emulate torch.squeeze(out, dim=1)
    return out2d[0]


def reference(inputs, params):
    w_in, b_in, w_mid, b_mid, w_out, b_out = params
    x = jnp.stack(inputs, axis=1)                     # (N, INP_DIM)
    h = x @ w_in + b_in
    for l in range(NUM_LAYERS):
        h = jnp.tanh(h @ w_mid[l] + b_mid[l]) + h
    y = h @ w_out + b_out
    return y[:, 0]


def init_params(key):
    k = jax.random.split(key, 6)
    w_in = jax.random.normal(k[0], (INP_DIM, HIDDEN), jnp.float32) * 0.5
    b_in = jax.random.normal(k[1], (1, HIDDEN), jnp.float32) * 0.1
    w_mid = jax.random.normal(k[2], (NUM_LAYERS, HIDDEN, HIDDEN), jnp.float32) * 0.2
    b_mid = jax.random.normal(k[3], (NUM_LAYERS, 1, HIDDEN), jnp.float32) * 0.1
    w_out = jax.random.normal(k[4], (HIDDEN, 1), jnp.float32) * 0.5
    b_out = jax.random.normal(k[5], (1, 1), jnp.float32) * 0.1
    return (w_in, b_in, w_mid, b_mid, w_out, b_out)


if __name__ == "__main__":
    key = jax.random.PRNGKey(0)
    kp, kx0, kx1 = jax.random.split(key, 3)
    params = init_params(kp)
    # Two scalar-valued input fields of shape (N,), stacked along dim=1.
    x0 = jax.random.normal(kx0, (N,), jnp.float32)
    x1 = jax.random.normal(kx1, (N,), jnp.float32)
    inputs = [x0, x1]

    out = nn_function_resnet(inputs, params)
    out = jax.block_until_ready(out)

    ref = reference(inputs, params)
    assert out.shape == (N,)
    assert jnp.allclose(out, ref, atol=1e-5, rtol=1e-5)
    print("KERNEL_OK")
</pallas_src>

<mosaic_0001>
module attributes {stable_mosaic.version = 11 : i64} {
  func.func @mlp_resnet_kernel(%arg0: memref<2x16xf32, #tpu.memory_space<vmem>>, %arg1: memref<32x2xf32, #tpu.memory_space<vmem>>, %arg2: memref<32x1xf32, #tpu.memory_space<vmem>>, %arg3: memref<2x32x32xf32, #tpu.memory_space<vmem>>, %arg4: memref<2x32x1xf32, #tpu.memory_space<vmem>>, %arg5: memref<32x1xf32, #tpu.memory_space<vmem>>, %arg6: memref<1x1xf32, #tpu.memory_space<vmem>>, %arg7: memref<1x16xf32, #tpu.memory_space<vmem>>) attributes {dimension_semantics = [], scalar_prefetch = 0 : i64, scratch_operands = 0 : i64, tpu.core_type = #tpu.core_type<tc>} {
    %c0 = arith.constant 0 : index
    %c0_0 = arith.constant 0 : index
    %0 = vector.load %arg0[%c0, %c0_0] : memref<2x16xf32, #tpu.memory_space<vmem>>, vector<2x16xf32>
    %c0_1 = arith.constant 0 : index
    %c0_2 = arith.constant 0 : index
    %1 = vector.load %arg1[%c0_1, %c0_2] : memref<32x2xf32, #tpu.memory_space<vmem>>, vector<32x1xf32>
    %2 = vector.extract_strided_slice %0 {offsets = [0, 0], sizes = [1, 16], strides = [1, 1]} : vector<2x16xf32> to vector<1x16xf32>
    %3 = vector.broadcast %1 : vector<32x1xf32> to vector<32x16xf32>
    %4 = vector.broadcast %2 : vector<1x16xf32> to vector<32x16xf32>
    %5 = arith.mulf %3, %4 : vector<32x16xf32>
    %c0_3 = arith.constant 0 : index
    %c0_4 = arith.constant 0 : index
    %6 = vector.load %arg2[%c0_3, %c0_4] : memref<32x1xf32, #tpu.memory_space<vmem>>, vector<32x1xf32>
    %7 = vector.broadcast %6 : vector<32x1xf32> to vector<32x16xf32>
    %8 = arith.addf %5, %7 : vector<32x16xf32>
    %c0_5 = arith.constant 0 : index
    %c1 = arith.constant 1 : index
    %9 = vector.load %arg1[%c0_5, %c1] : memref<32x2xf32, #tpu.memory_space<vmem>>, vector<32x1xf32>
    %10 = vector.extract_strided_slice %0 {offsets = [1, 0], sizes = [1, 16], strides = [1, 1]} : vector<2x16xf32> to vector<1x16xf32>
    %11 = vector.broadcast %9 : vector<32x1xf32> to vector<32x16xf32>
    %12 = vector.broadcast %10 : vector<1x16xf32> to vector<32x16xf32>
    %13 = arith.mulf %11, %12 : vector<32x16xf32>
    %14 = arith.addf %8, %13 : vector<32x16xf32>
    %c0_6 = arith.constant 0 : index
    %c0_7 = arith.constant 0 : index
    %c0_8 = arith.constant 0 : index
    %15 = vector.load %arg3[%c0_6, %c0_7, %c0_8] : memref<2x32x32xf32, #tpu.memory_space<vmem>>, vector<1x32x32xf32>
    %16 = vector.shape_cast %15 : vector<1x32x32xf32> to vector<32x32xf32>
    %c0_9 = arith.constant 0 : index
    %c0_10 = arith.constant 0 : index
    %c0_11 = arith.constant 0 : index
    %17 = vector.load %arg4[%c0_9, %c0_10, %c0_11] : memref<2x32x1xf32, #tpu.memory_space<vmem>>, vector<1x32x1xf32>
    %18 = vector.shape_cast %17 : vector<1x32x1xf32> to vector<32x1xf32>
    %cst = arith.constant dense<0.000000e+00> : vector<32x16xf32>
    %19 = tpu.matmul %16, %14, %cst {dimension_numbers = #tpu.dot_dimension_numbers<[1], [0], [0], [1], [0, 0, 1, 1], [], []>} : vector<32x32xf32>, vector<32x16xf32>, vector<32x16xf32> -> vector<32x16xf32>
    %20 = vector.broadcast %18 : vector<32x1xf32> to vector<32x16xf32>
    %21 = arith.addf %19, %20 : vector<32x16xf32>
    %22 = math.tanh %21 : vector<32x16xf32>
    %23 = arith.addf %22, %14 : vector<32x16xf32>
    %c1_12 = arith.constant 1 : index
    %c0_13 = arith.constant 0 : index
    %c0_14 = arith.constant 0 : index
    %24 = vector.load %arg3[%c1_12, %c0_13, %c0_14] : memref<2x32x32xf32, #tpu.memory_space<vmem>>, vector<1x32x32xf32>
    %25 = vector.shape_cast %24 : vector<1x32x32xf32> to vector<32x32xf32>
    %c1_15 = arith.constant 1 : index
    %c0_16 = arith.constant 0 : index
    %c0_17 = arith.constant 0 : index
    %26 = vector.load %arg4[%c1_15, %c0_16, %c0_17] : memref<2x32x1xf32, #tpu.memory_space<vmem>>, vector<1x32x1xf32>
    %27 = vector.shape_cast %26 : vector<1x32x1xf32> to vector<32x1xf32>
    %cst_18 = arith.constant dense<0.000000e+00> : vector<32x16xf32>
    %28 = tpu.matmul %25, %23, %cst_18 {dimension_numbers = #tpu.dot_dimension_numbers<[1], [0], [0], [1], [0, 0, 1, 1], [], []>} : vector<32x32xf32>, vector<32x16xf32>, vector<32x16xf32> -> vector<32x16xf32>
    %29 = vector.broadcast %27 : vector<32x1xf32> to vector<32x16xf32>
    %30 = arith.addf %28, %29 : vector<32x16xf32>
    %31 = math.tanh %30 : vector<32x16xf32>
    %32 = arith.addf %31, %23 : vector<32x16xf32>
    %c0_19 = arith.constant 0 : index
    %c0_20 = arith.constant 0 : index
    %33 = vector.load %arg5[%c0_19, %c0_20] : memref<32x1xf32, #tpu.memory_space<vmem>>, vector<32x1xf32>
    %34 = vector.broadcast %33 : vector<32x1xf32> to vector<32x16xf32>
    %35 = arith.mulf %32, %34 : vector<32x16xf32>
    %cst_21 = arith.constant dense<0.000000e+00> : vector<16xf32>
    %36 = vector.multi_reduction <add>, %35, %cst_21 [0] : vector<32x16xf32> to vector<16xf32>
    %37 = vector.shape_cast %36 : vector<16xf32> to vector<1x16xf32>
    %c0_22 = arith.constant 0 : index
    %c0_23 = arith.constant 0 : index
    %38 = vector.load %arg6[%c0_22, %c0_23] : memref<1x1xf32, #tpu.memory_space<vmem>>, vector<1x1xf32>
    %39 = vector.broadcast %38 : vector<1x1xf32> to vector<1x16xf32>
    %40 = arith.addf %37, %39 : vector<1x16xf32>
    %c0_24 = arith.constant 0 : index
    %c0_25 = arith.constant 0 : index
    %41 = vector.load %arg7[%c0_24, %c0_25] : memref<1x16xf32, #tpu.memory_space<vmem>>, vector<1x16xf32>
    tpu.vector_store %arg7[%c0_24, %c0_25], %40 {strides = array<i32>} : memref<1x16xf32, #tpu.memory_space<vmem>>, vector<1x16xf32>,
    return
  }
}

</mosaic_0001>

<llo_original>
// kernel: tpu_custom_call.1
$region0: #{tpu_custom_call.1}
  #allocation0 [shape = 'u32[]', space=smem, size = 0x4, offset = 0x4, fixed_abs, tag = 'smem constant byte address 0x4 - core index']
  #allocation1 [shape = 'u32[144,128]{1,0:T(1,128)}', space=vmem, size = 0x12000, scoped, tag = 'internal scratch']
  #allocation2 [shape = 'f32[1,1]{1,0:T(1,128)S(1)}', space=vmem, size = 0x200, scoped, tag = 'scoped memory for tpu_custom_call.1']
  %s0 = inlined_call_operand.vmem [shape: f32[2,16], index: 0, kind: input, shape index: {}]
  %s1 = inlined_call_operand.vmem [shape: f32[32,2], index: 1, kind: input, shape index: {}]
  %s2 = inlined_call_operand.vmem [shape: f32[32,1], index: 2, kind: input, shape index: {}]
  %s3 = inlined_call_operand.vmem [shape: f32[2,32,32], index: 3, kind: input, shape index: {}]
  %s4 = inlined_call_operand.vmem [shape: f32[2,32,1], index: 4, kind: input, shape index: {}]
  %s5 = inlined_call_operand.vmem [shape: f32[32,1], index: 5, kind: input, shape index: {}]
  %s6 = inlined_call_operand.<no memory space> [shape: f32[1,1], index: 6, kind: input, shape index: {}]
  %s7 = inlined_call_operand.hbm [shape: f32[1,16], index: 7, kind: output, shape index: {}]
  %s8 = sld [smem:[#allocation0]]
  $region38: #{tpu_custom_call.1} parent=0
    _
  %s10 = ssub.s32 1, %s8
  %s11 = scalar_select 0, %s10, %s8
  %v12 = vstv %s6
  %13 = vst [vmem:[#allocation2] sm:$0x1] %v12
  $region1: #{tpu_custom_call.1} parent=0
    #allocation3 [shape = 'u8[512]{0}', space=vmem, size = 0x400, scoped, tag = 'output window, operand 0, single buffered']
    #allocation4 [shape = 's32[1]{0}', space=sflag, size = 0x4, scoped, tag = 'scoped memory for tpu_custom_call.1']
    %14 = vsyncpa [#allocation4], 0
    // Predicated region
    $region2: #{tpu_custom_call.1} parent=1 // pred_check
      _
    $region3: #{tpu_custom_call.1} parent=1 // pred_check_branch
      %16 = sbr.rel (0) target = $region5
    $region4: #{tpu_custom_call.1} parent=1 // pred_region
      _
    $region5: #{tpu_custom_call.1} parent=1 // pred_fallthru
      _
    // Predicated region
    $region6: #{tpu_custom_call.1} parent=1 // pred_check
      _
    $region7: #{tpu_custom_call.1} parent=1 // pred_check_branch
      %18 = sbr.rel (0) target = $region9
    $region8: #{tpu_custom_call.1} parent=1 // pred_region
      _
    $region9: #{tpu_custom_call.1} parent=1 // pred_fallthru
      _
    // Predicated region
    $region10: #{tpu_custom_call.1} parent=1 // pred_check
      _
    $region11: #{tpu_custom_call.1} parent=1 // pred_check_branch
      %20 = sbr.rel (0) target = $region13
    $region12: #{tpu_custom_call.1} parent=1 // pred_region
      _
    $region13: #{tpu_custom_call.1} parent=1 // pred_fallthru
      _
    // Predicated region
    $region14: #{tpu_custom_call.1} parent=1 // pred_check
      _
    $region15: #{tpu_custom_call.1} parent=1 // pred_check_branch
      %22 = sbr.rel (0) target = $region17
    $region16: #{tpu_custom_call.1} parent=1 // pred_region
      _
    $region17: #{tpu_custom_call.1} parent=1 // pred_fallthru
      _
    // Predicated region
    $region18: #{tpu_custom_call.1} parent=1 // pred_check
      _
    $region19: #{tpu_custom_call.1} parent=1 // pred_check_branch
      %24 = sbr.rel (0) target = $region21
    $region20: #{tpu_custom_call.1} parent=1 // pred_region
      _
    $region21: #{tpu_custom_call.1} parent=1 // pred_fallthru
      _
    // Predicated region
    $region22: #{tpu_custom_call.1} parent=1 // pred_check
      _
    $region23: #{tpu_custom_call.1} parent=1 // pred_check_branch
      %26 = sbr.rel (0) target = $region25
    $region24: #{tpu_custom_call.1} parent=1 // pred_region
      _
    $region25: #{tpu_custom_call.1} parent=1 // pred_fallthru
      _
    // Predicated region
    $region26: #{tpu_custom_call.1} parent=1 // pred_check
      _
    $region27: #{tpu_custom_call.1} parent=1 // pred_check_branch
      %28 = sbr.rel (0) target = $region29
    $region28: #{tpu_custom_call.1} parent=1 // pred_region
      _
    $region29: #{tpu_custom_call.1} parent=1 // pred_fallthru
      _
    %v29 = vld [vmem:[%s0] sm:$0x3]
    %v30 = vld [vmem:[%s1] sm:$0xff]
    %v31 = vld [vmem:[%s1 + $0x8] sm:$0xff]
    %v32 = vld [vmem:[%s1 + $0x10] sm:$0xff]
    %v33 = vld [vmem:[%s1 + $0x18] sm:$0xff]
    %35 = vset.pattern.permute.xlu0 0
    %36 = vperm.xlu0 %35, %v30
    %v37 = vpop.permute.xlu0 %36
    %40 = vset.pattern.permute.xlu0 0
    %41 = vperm.xlu0 %40, %v31
    %v42 = vpop.permute.xlu0 %41
    %45 = vset.pattern.permute.xlu0 0
    %46 = vperm.xlu0 %45, %v32
    %v47 = vpop.permute.xlu0 %46
    %50 = vset.pattern.permute.xlu0 0
    %51 = vperm.xlu0 %50, %v33
    %v52 = vpop.permute.xlu0 %51
    %v54 = vlaneseq
    %v55 = vshrl.u32 %v54, 7
    %v56 = vsub.s32 0, %v55
    %v57 = vrot.slane %v29, %v56
    %v58 = vmul.f32 %v37, %v57
    %v59 = vmul.f32 %v42, %v57
    %v60 = vmul.f32 %v47, %v57
    %v61 = vmul.f32 %v52, %v57
    %v62 = vld [vmem:[%s2] sm:$0xff]
    %v63 = vld [vmem:[%s2 + $0x8] sm:$0xff]
    %v64 = vld [vmem:[%s2 + $0x10] sm:$0xff]
    %v65 = vld [vmem:[%s2 + $0x18] sm:$0xff]
    %67 = vset.pattern.permute.xlu0 0
    %68 = vperm.xlu0 %67, %v62
    %v69 = vpop.permute.xlu0 %68
    %72 = vset.pattern.permute.xlu0 0
    %73 = vperm.xlu0 %72, %v63
    %v74 = vpop.permute.xlu0 %73
    %77 = vset.pattern.permute.xlu0 0
    %78 = vperm.xlu0 %77, %v64
    %v79 = vpop.permute.xlu0 %78
    %82 = vset.pattern.permute.xlu0 0
    %83 = vperm.xlu0 %82, %v65
    %v84 = vpop.permute.xlu0 %83
    %v86 = vadd.f32 %v58, %v69
    %v87 = vadd.f32 %v59, %v74
    %v88 = vadd.f32 %v60, %v79
    %v89 = vadd.f32 %v61, %v84
    %90 = vset.pattern.permute.xlu0 1
    %91 = vperm.xlu0 %90, %v30
    %v92 = vpop.permute.xlu0 %91
    %94 = vset.pattern.permute.xlu0 1
    %95 = vperm.xlu0 %94, %v31
    %v96 = vpop.permute.xlu0 %95
    %98 = vset.pattern.permute.xlu0 1
    %99 = vperm.xlu0 %98, %v32
    %v100 = vpop.permute.xlu0 %99
    %102 = vset.pattern.permute.xlu0 1
    %103 = vperm.xlu0 %102, %v33
    %v104 = vpop.permute.xlu0 %103
    %v106 = vlaneseq
    %v107 = vshrl.u32 %v106, 7
    %v108 = vsub.s32 1, %v107
    %v109 = vrot.slane %v29, %v108
    %v110 = vmul.f32 %v92, %v109
    %v111 = vmul.f32 %v96, %v109
    %v112 = vmul.f32 %v100, %v109
    %v113 = vmul.f32 %v104, %v109
    %v114 = vadd.f32 %v86, %v110
    %v115 = vadd.f32 %v87, %v111
    %v116 = vadd.f32 %v88, %v112
    %v117 = vadd.f32 %v89, %v113
    %v118 = vld [vmem:[%s3] sm:$0xff]
    %v119 = vld [vmem:[%s3 + $0x8] sm:$0xff]
    %v120 = vld [vmem:[%s3 + $0x10] sm:$0xff]
    %v121 = vld [vmem:[%s3 + $0x18] sm:$0xff]
    %v122 = vld [vmem:[%s4] sm:$0xff]
    %v123 = vld [vmem:[%s4 + $0x8] sm:$0xff]
    %v124 = vld [vmem:[%s4 + $0x10] sm:$0xff]
    %v125 = vld [vmem:[%s4 + $0x18] sm:$0xff]
    %127 = vset.pattern.permute.xlu0 0
    %128 = vperm.xlu0 %127, %v122
    %v129 = vpop.permute.xlu0 %128
    %132 = vset.pattern.permute.xlu0 0
    %133 = vperm.xlu0 %132, %v123
    %v134 = vpop.permute.xlu0 %133
    %137 = vset.pattern.permute.xlu0 0
    %138 = vperm.xlu0 %137, %v124
    %v139 = vpop.permute.xlu0 %138
    %142 = vset.pattern.permute.xlu0 0
    %143 = vperm.xlu0 %142, %v125
    %v144 = vpop.permute.xlu0 %143
    %vm146 = vcmask 261120
    %v148 = vsel %vm146, %v118, 0
    %v151 = vsel %vm146, %v119, 0
    %v154 = vsel %vm146, %v120, 0
    %v157 = vsel %vm146, %v121, 0
    %159 = vmatprep.subr.mxu0 0.0
    %160 = vmatpush1.msra.mxu0 %v114
    %161 = vmatprep.subr.mxu0 0.0
    %162 = vmatpush1.msra.mxu0 %v115
    %163 = vmatprep.subr.mxu0 0.0
    %164 = vmatpush1.msra.mxu0 %v116
    %165 = vmatprep.subr.mxu0 0.0
    %166 = vmatpush1.msra.mxu0 %v117
    %167 = vmatprep.subr.mxu0 0.0
    %168 = vmatpush1.msra.mxu0 0.0
    %169 = vmatprep.subr.mxu0 0.0
    %170 = vmatpush1.msra.mxu0 0.0
    %171 = vmatprep.subr.mxu0 0.0
    %172 = vmatpush1.msra.mxu0 0.0
    %173 = vmatprep.subr.mxu0 0.0
    %174 = vmatpush1.msra.mxu0 0.0
    %175 = vmatprep.subr.mxu0 0.0
    %176 = vmatpush1.msra.mxu0 0.0
    %177 = vmatprep.subr.mxu0 0.0
    %178 = vmatpush1.msra.mxu0 0.0
    %179 = vmatprep.subr.mxu0 0.0
    %180 = vmatpush1.msra.mxu0 0.0
    %181 = vmatprep.subr.mxu0 0.0
    %182 = vmatpush1.msra.mxu0 0.0
    %183 = vmatprep.subr.mxu0 0.0
    %184 = vmatpush1.msra.mxu0 0.0
    %185 = vmatprep.subr.mxu0 0.0
    %186 = vmatpush1.msra.mxu0 0.0
    %187 = vmatprep.subr.mxu0 0.0
    %188 = vmatpush1.msra.mxu0 0.0
    %189 = vmatprep.subr.mxu0 0.0
    %190 = vmatpush1.msra.mxu0 0.0
    %191 = vmatprep.subr.mxu0 0.0
    %192 = vmatpush1.msra.mxu0 0.0
    %193 = vmatprep.subr.mxu0 0.0
    %194 = vmatpush1.msra.mxu0 0.0
    %195 = vmatprep.subr.mxu0 0.0
    %196 = vmatpush1.msra.mxu0 0.0
    %197 = vmatprep.subr.mxu0 0.0
    %198 = vmatpush1.msra.mxu0 0.0
    %199 = vmatprep.subr.mxu0 0.0
    %200 = vmatpush1.msra.mxu0 0.0
    %201 = vmatprep.subr.mxu0 0.0
    %202 = vmatpush1.msra.mxu0 0.0
    %203 = vmatprep.subr.mxu0 0.0
    %204 = vmatpush1.msra.mxu0 0.0
    %205 = vmatprep.subr.mxu0 0.0
    %206 = vmatpush1.msra.mxu0 0.0
    %207 = vmatprep.subr.mxu0 0.0
    %208 = vmatpush1.msra.mxu0 0.0
    %209 = vmatprep.subr.mxu0 0.0
    %210 = vmatpush1.msra.mxu0 0.0
    %211 = vmatprep.subr.mxu0 0.0
    %212 = vmatpush1.msra.mxu0 0.0
    %213 = vmatprep.subr.mxu0 0.0
    %214 = vmatpush1.msra.mxu0 0.0
    %215 = vmatprep.subr.mxu0 0.0
    %216 = vmatpush1.msra.mxu0 0.0
    %217 = vmatprep.subr.mxu0 0.0
    %218 = vmatpush1.msra.mxu0 0.0
    %219 = vmatprep.subr.mxu0 0.0
    %220 = vmatpush1.msra.mxu0 0.0
    %221 = vmatprep.subr.mxu0 0.0
    %222 = vmatpush1.msra.mxu0 0.0
    %223 = vmatprep.mubr.f32.mxu0 0.0
    %224 = vmatmul.mubr.f32.gmra.mrb[0].mxu0 %v148
    %v225 = vpop.f32.mrb[0].mxu0
    %v226 = vadd.f32 %v129, %v225
    %v227 = vpop.f32.mrb[0].mxu0
    %228 = vmatprep.mubr.f32.mxu0 0.0
    %229 = vmatmul.mubr.f32.gmra.mrb[0].mxu0 %v151
    %v230 = vpop.f32.mrb[0].mxu0
    %v231 = vadd.f32 %v134, %v230
    %v232 = vpop.f32.mrb[0].mxu0
    %233 = vmatprep.mubr.f32.mxu0 0.0
    %234 = vmatmul.mubr.f32.gmra.mrb[0].mxu0 %v154
    %v235 = vpop.f32.mrb[0].mxu0
    %v236 = vadd.f32 %v139, %v235
    %v237 = vpop.f32.mrb[0].mxu0
    %238 = vmatprep.mubr.f32.mxu0 0.0
    %239 = vmatmul.mubr.f32.gmra.mrb[0].mxu0 %v157
    %v240 = vpop.f32.mrb[0].mxu0
    %v241 = vadd.f32 %v144, %v240
    %v242 = vpop.f32.mrb[0].mxu0
    %243 = vdwg.mxu0
    %v244 = vtanh.pop %v226
    %v245 = vtanh.pop %v231
    %v246 = vtanh.pop %v236
    %v247 = vtanh.pop %v241
    %v248 = vadd.f32 %v244, %v114
    %v249 = vadd.f32 %v245, %v115
    %v250 = vadd.f32 %v246, %v116
    %v251 = vadd.f32 %v247, %v117
    %s252 = scalar_lea.vmem %s3, 32
    %v253 = vld [vmem:[%s252] sm:$0xff]
    %v254 = vld [vmem:[%s252 + $0x8] sm:$0xff]
    %v255 = vld [vmem:[%s252 + $0x10] sm:$0xff]
    %v256 = vld [vmem:[%s252 + $0x18] sm:$0xff]
    %s257 = scalar_lea.vmem %s4, 32
    %v258 = vld [vmem:[%s257] sm:$0xff]
    %v259 = vld [vmem:[%s257 + $0x8] sm:$0xff]
    %v260 = vld [vmem:[%s257 + $0x10] sm:$0xff]
    %v261 = vld [vmem:[%s257 + $0x18] sm:$0xff]
    %263 = vset.pattern.permute.xlu0 0
    %264 = vperm.xlu0 %263, %v258
    %v265 = vpop.permute.xlu0 %264
    %268 = vset.pattern.permute.xlu0 0
    %269 = vperm.xlu0 %268, %v259
    %v270 = vpop.permute.xlu0 %269
    %273 = vset.pattern.permute.xlu0 0
    %274 = vperm.xlu0 %273, %v260
    %v275 = vpop.permute.xlu0 %274
    %278 = vset.pattern.permute.xlu0 0
    %279 = vperm.xlu0 %278, %v261
    %v280 = vpop.permute.xlu0 %279
    %v283 = vsel %vm146, %v253, 0
    %v286 = vsel %vm146, %v254, 0
    %v289 = vsel %vm146, %v255, 0
    %v292 = vsel %vm146, %v256, 0
    %294 = vmatprep.subr.mxu0 0.0
    %295 = vmatpush1.msra.mxu0 %v248
    %296 = vmatprep.subr.mxu0 0.0
    %297 = vmatpush1.msra.mxu0 %v249
    %298 = vmatprep.subr.mxu0 0.0
    %299 = vmatpush1.msra.mxu0 %v250
    %300 = vmatprep.subr.mxu0 0.0
    %301 = vmatpush1.msra.mxu0 %v251
    %302 = vmatprep.subr.mxu0 0.0
    %303 = vmatpush1.msra.mxu0 0.0
    %304 = vmatprep.subr.mxu0 0.0
    %305 = vmatpush1.msra.mxu0 0.0
    %306 = vmatprep.subr.mxu0 0.0
    %307 = vmatpush1.msra.mxu0 0.0
    %308 = vmatprep.subr.mxu0 0.0
    %309 = vmatpush1.msra.mxu0 0.0
    %310 = vmatprep.subr.mxu0 0.0
    %311 = vmatpush1.msra.mxu0 0.0
    %312 = vmatprep.subr.mxu0 0.0
    %313 = vmatpush1.msra.mxu0 0.0
    %314 = vmatprep.subr.mxu0 0.0
    %315 = vmatpush1.msra.mxu0 0.0
    %316 = vmatprep.subr.mxu0 0.0
    %317 = vmatpush1.msra.mxu0 0.0
    %318 = vmatprep.subr.mxu0 0.0
    %319 = vmatpush1.msra.mxu0 0.0
    %320 = vmatprep.subr.mxu0 0.0
    %321 = vmatpush1.msra.mxu0 0.0
    %322 = vmatprep.subr.mxu0 0.0
    %323 = vmatpush1.msra.mxu0 0.0
    %324 = vmatprep.subr.mxu0 0.0
    %325 = vmatpush1.msra.mxu0 0.0
    %326 = vmatprep.subr.mxu0 0.0
    %327 = vmatpush1.msra.mxu0 0.0
    %328 = vmatprep.subr.mxu0 0.0
    %329 = vmatpush1.msra.mxu0 0.0
    %330 = vmatprep.subr.mxu0 0.0
    %331 = vmatpush1.msra.mxu0 0.0
    %332 = vmatprep.subr.mxu0 0.0
    %333 = vmatpush1.msra.mxu0 0.0
    %334 = vmatprep.subr.mxu0 0.0
    %335 = vmatpush1.msra.mxu0 0.0
    %336 = vmatprep.subr.mxu0 0.0
    %337 = vmatpush1.msra.mxu0 0.0
    %338 = vmatprep.subr.mxu0 0.0
    %339 = vmatpush1.msra.mxu0 0.0
    %340 = vmatprep.subr.mxu0 0.0
    %341 = vmatpush1.msra.mxu0 0.0
    %342 = vmatprep.subr.mxu0 0.0
    %343 = vmatpush1.msra.mxu0 0.0
    %344 = vmatprep.subr.mxu0 0.0
    %345 = vmatpush1.msra.mxu0 0.0
    %346 = vmatprep.subr.mxu0 0.0
    %347 = vmatpush1.msra.mxu0 0.0
    %348 = vmatprep.subr.mxu0 0.0
    %349 = vmatpush1.msra.mxu0 0.0
    %350 = vmatprep.subr.mxu0 0.0
    %351 = vmatpush1.msra.mxu0 0.0
    %352 = vmatprep.subr.mxu0 0.0
    %353 = vmatpush1.msra.mxu0 0.0
    %354 = vmatprep.subr.mxu0 0.0
    %355 = vmatpush1.msra.mxu0 0.0
    %356 = vmatprep.subr.mxu0 0.0
    %357 = vmatpush1.msra.mxu0 0.0
    %358 = vmatprep.mubr.f32.mxu0 0.0
    %359 = vmatmul.mubr.f32.gmra.mrb[0].mxu0 %v283
    %v360 = vpop.f32.mrb[0].mxu0
    %v361 = vadd.f32 %v265, %v360
    %v362 = vpop.f32.mrb[0].mxu0
    %363 = vmatprep.mubr.f32.mxu0 0.0
    %364 = vmatmul.mubr.f32.gmra.mrb[0].mxu0 %v286
    %v365 = vpop.f32.mrb[0].mxu0
    %v366 = vadd.f32 %v270, %v365
    %v367 = vpop.f32.mrb[0].mxu0
    %368 = vmatprep.mubr.f32.mxu0 0.0
    %369 = vmatmul.mubr.f32.gmra.mrb[0].mxu0 %v289
    %v370 = vpop.f32.mrb[0].mxu0
    %v371 = vadd.f32 %v275, %v370
    %v372 = vpop.f32.mrb[0].mxu0
    %373 = vmatprep.mubr.f32.mxu0 0.0
    %374 = vmatmul.mubr.f32.gmra.mrb[0].mxu0 %v292
    %v375 = vpop.f32.mrb[0].mxu0
    %v376 = vadd.f32 %v280, %v375
    %v377 = vpop.f32.mrb[0].mxu0
    %378 = vdwg.mxu0
    %v379 = vtanh.pop %v361
    %v380 = vtanh.pop %v366
    %v381 = vtanh.pop %v371
    %v382 = vtanh.pop %v376
    %v383 = vadd.f32 %v379, %v248
    %v384 = vadd.f32 %v380, %v249
    %v385 = vadd.f32 %v381, %v250
    %v386 = vadd.f32 %v382, %v251
    %v387 = vld [vmem:[%s5] sm:$0xff]
    %v388 = vld [vmem:[%s5 + $0x8] sm:$0xff]
    %v389 = vld [vmem:[%s5 + $0x10] sm:$0xff]
    %v390 = vld [vmem:[%s5 + $0x18] sm:$0xff]
    %392 = vset.pattern.permute.xlu0 0
    %393 = vperm.xlu0 %392, %v387
    %v394 = vpop.permute.xlu0 %393
    %397 = vset.pattern.permute.xlu0 0
    %398 = vperm.xlu0 %397, %v388
    %v399 = vpop.permute.xlu0 %398
    %402 = vset.pattern.permute.xlu0 0
    %403 = vperm.xlu0 %402, %v389
    %v404 = vpop.permute.xlu0 %403
    %407 = vset.pattern.permute.xlu0 0
    %408 = vperm.xlu0 %407, %v390
    %v409 = vpop.permute.xlu0 %408
    %v411 = vmul.f32 %v383, %v394
    %v412 = vmul.f32 %v384, %v399
    %v413 = vmul.f32 %v385, %v404
    %v414 = vmul.f32 %v386, %v409
    %vm415 = vcmask 130048
    %v416 = vsel %vm415, %v411, 0.0
    %v417 = vsel %vm415, %v412, 0.0
    %v418 = vadd.f32 %v416, %v417
    %v419 = vsel %vm415, %v413, 0.0
    %v420 = vadd.f32 %v418, %v419
    %v421 = vsel %vm415, %v414, 0.0
    %v422 = vadd.f32 %v420, %v421
    %v423 = vrot.slane %v422, 4
    %v424 = vadd.f32 %v422, %v423
    %v425 = vrot.slane %v424, 2
    %v426 = vadd.f32 %v424, %v425
    %v427 = vrot.slane %v426, 1
    %v428 = vadd.f32 %v426, %v427
    %v429 = vld [vmem:[#allocation2] sm:$0x1]
    %431 = vset.pattern.permute.xlu0 0
    %432 = vperm.xlu0 %431, %v429
    %v433 = vpop.permute.xlu0 %432
    %v435 = vlaneseq
    %v436 = vshrl.u32 %v435, 7
    %v437 = vsub.s32 0, %v436
    %v438 = vrot.slane %v433, %v437
    %v439 = vadd.f32 %v428, %v438
    %vm440 = vcmask 122880
    %441 = vst.msk [vmem:[#allocation3] sm:$0x1] %vm440, %v439
    // Predicated region
    $region30: #{tpu_custom_call.1} parent=1 // pred_check
      _
    $region31: #{tpu_custom_call.1} parent=1 // pred_check_branch
      %443 = sbr.rel (0) target = $region33
    $region32: #{tpu_custom_call.1} parent=1 // pred_region
      %s445 = ssub.s32 16, 16
      %446 = vsyncadd [#allocation4], %s445
      %s448 = sshll.u32 [#allocation3], 4
      %s449 = int_to_ptr.vmem [resolvable:$true] %s448
      %451 = dma.vmem_to_hbm [thread:$0]  %s449, 16, %s7, [#allocation4]
    $region33: #{tpu_custom_call.1} parent=1 // pred_fallthru
      _
    // Predicated region
    $region34: #{tpu_custom_call.1} parent=1 // pred_check
      _
    $region35: #{tpu_custom_call.1} parent=1 // pred_check_branch
      %453 = sbr.rel (0) target = $region37
    $region36: #{tpu_custom_call.1} parent=1 // pred_region
      %454 = dma.done [#allocation4], 16
    $region37: #{tpu_custom_call.1} parent=1 // pred_fallthru
      _
    %455 = vsyncpa [#allocation4], 1

</llo_original>
